<compile_context>
chip_gen: v7x
topology: tpu7x:2x2x1
jax: 0.10.0
libtpu: 0.0.40
codegen_flags: <defaults>
</compile_context>

<pallas_src>
import functools

import jax
import jax.numpy as jnp
from jax.experimental import pallas as pl
from jax.experimental.pallas import tpu as pltpu

_BN_EPS = 1e-5


def mlp_kernel(x_ref, w1_ref, gb_ref, w2_ref, b2_ref, o_ref, *, inv_n, n_valid):
    j = pl.program_id(1)                       # hidden (reduction) axis, innermost

    # ---- layer 0 partial: (Np, in_pad) @ (in_pad, TILE_H), bf16 MXU inputs, f32 acc -----
    h = jnp.dot(x_ref[...], w1_ref[...], preferred_element_type=jnp.float32)

    # ---- BatchNorm1d, training-mode batch statistics (two-pass variance) ----------------
    # Padded batch rows of x are all-zero -> their h rows are exactly 0 (no b1), so the sum
    # is unaffected; inv_n is 1/true_N and padded rows are masked out of the centered pass.
    mean = jnp.sum(h, axis=0, keepdims=True) * inv_n
    centered = h - mean
    if n_valid != h.shape[0]:
        row = jax.lax.broadcasted_iota(jnp.int32, (h.shape[0], 1), 0)
        centered = jnp.where(row < n_valid, centered, 0.0)
    var = jnp.sum(centered * centered, axis=0, keepdims=True) * inv_n   # biased (PyTorch)
    scale = gb_ref[0:1, :] * jax.lax.rsqrt(var + _BN_EPS)               # gamma * rsqrt
    a = jnp.maximum(centered * scale + gb_ref[1:2, :], 0.0)             # + beta, ReLU

    # ---- layer 1 partial, accumulated directly into the resident f32 output block -------
    contrib = jnp.dot(a.astype(jnp.bfloat16), w2_ref[...],
                      preferred_element_type=jnp.float32)

    @pl.when(j == 0)
    def _init():
        o_ref[...] = jnp.broadcast_to(b2_ref[...], o_ref.shape)

    o_ref[...] += contrib


def _round_up(v, m):
    return ((v + m - 1) // m) * m


def _vmem_capacity_bytes():
    try:
        cap = getattr(pltpu.get_tpu_info(), "vmem_capacity_bytes", None)
        if cap:
            return int(cap)
    except Exception:
        pass
    return 128 * 2**20                          # v5e/v6e default; v7x reports 64 MiB


def _is_megacore():
    # v7x / v5p / v4 have 2 TensorCores per chip; v5e/v6e are single-core.
    try:
        kind = jax.devices()[0].device_kind.lower()
        return ("v7" in kind) or ("v5p" in kind) or ("v4" in kind)
    except Exception:
        return False


def _pick_tile_h(h_pad, in_pad, tile_out, budget_bytes):
    # Prefer 256-multiples (v6e/v7x MXU is 256 wide); 128 matches v5e / small hidden dims.
    for t in (512, 256, 128):
        if h_pad % t == 0:
            streamed = 2 * (in_pad * t + t * tile_out) * 2   # double-buffered bf16 tiles
            if streamed <= budget_bytes or t == 128:
                return t
    return 128


def mlp_forward(x, w1, b1, gamma, beta, w2, b2, *, single_buffer_invariants=True):
    # b1 is accepted for parity with the PyTorch module but intentionally unused:
    # training-mode BatchNorm1d subtracts the batch mean right after the first Linear,
    # which cancels the bias exactly.
    del b1
    n, in_dim = x.shape
    hidden = w1.shape[1]
    out_dim = w2.shape[1]

    in_pad = _round_up(in_dim, 128)
    h_pad = _round_up(hidden, 128)
    out_pad = _round_up(out_dim, 128)
    n_pad = _round_up(n, 16)                    # bf16 sublane packing for x

    # Optional megacore output split: each core redoes the cheap x@w1-tile + BN for its
    # hidden tiles but owns a disjoint column slice of w2 and of the output.
    n_out_tiles = 2 if (_is_megacore() and out_pad % 256 == 0) else 1
    tile_out = out_pad // n_out_tiles

    cap = _vmem_capacity_bytes()
    tile_h = _pick_tile_h(h_pad, in_pad, tile_out, budget_bytes=cap // 4)
    grid = (n_out_tiles, h_pad // tile_h)

    # Lane-dense zero padding (exact no-op through Linear/BN/ReLU/Linear here: padded
    # hidden features have w1-cols = gamma = beta = 0 -> normalize to exactly 0).
    xp = jnp.pad(x, ((0, n_pad - n), (0, in_pad - in_dim))).astype(jnp.bfloat16)
    w1p = jnp.pad(w1, ((0, in_pad - in_dim), (0, h_pad - hidden))).astype(jnp.bfloat16)
    w2p = jnp.pad(w2, ((0, h_pad - hidden), (0, out_pad - out_dim))).astype(jnp.bfloat16)
    gbp = jnp.concatenate(
        [jnp.pad(gamma, ((0, 0), (0, h_pad - hidden))),
         jnp.pad(beta, ((0, 0), (0, h_pad - hidden)))], axis=0).astype(jnp.float32)
    b2p = jnp.pad(b2, ((0, 0), (0, out_pad - out_dim))).astype(jnp.float32)

    # VMEM footprint: single-buffered resident blocks + double-buffered streamed tiles.
    resident = n_pad * in_pad * 2 + n_pad * tile_out * 4 + tile_out * 4
    streamed = 2 * ((in_pad * tile_h + tile_h * tile_out) * 2 + 2 * tile_h * 4)
    need = resident + streamed
    vmem_limit = min(int(0.75 * cap), max(32 * 2**20, 2 * need))
    vmem_limit = max(vmem_limit, min(need + (4 << 20), int(0.9 * cap)))

    cost = pl.CostEstimate(
        flops=2 * n_pad * in_pad * h_pad * n_out_tiles + 2 * n_pad * h_pad * out_pad,
        transcendentals=h_pad * n_out_tiles,      # one rsqrt per hidden feature
        bytes_accessed=(xp.size * 2 + w1p.size * 2 * n_out_tiles + w2p.size * 2
                        + gbp.size * 4 * n_out_tiles + b2p.size * 4 + n_pad * out_pad * 4),
    )

    # Grid-invariant blocks don't need double buffering.
    pm = {"pipeline_mode": pl.Buffered(1)} if single_buffer_invariants else {}

    kernel = functools.partial(mlp_kernel, inv_n=1.0 / n, n_valid=n)

    out_padded = pl.pallas_call(
        kernel,
        out_shape=jax.ShapeDtypeStruct((n_pad, out_pad), jnp.float32),
        grid_spec=pltpu.PrefetchScalarGridSpec(
            num_scalar_prefetch=0,
            grid=grid,
            in_specs=[
                pl.BlockSpec((n_pad, in_pad), lambda i, j: (0, 0), **pm),   # x: resident
                pl.BlockSpec((in_pad, tile_h), lambda i, j: (0, j)),        # w1: stream hidden
                pl.BlockSpec((2, tile_h), lambda i, j: (0, j)),             # gamma|beta
                pl.BlockSpec((tile_h, tile_out), lambda i, j: (j, i)),      # w2: stream hidden
                pl.BlockSpec((1, tile_out), lambda i, j: (0, i), **pm),     # b2
            ],
            out_specs=pl.BlockSpec((n_pad, tile_out), lambda i, j: (0, i), **pm),
        ),
        compiler_params=pltpu.CompilerParams(
            dimension_semantics=("parallel", "arbitrary"),   # hidden axis is a reduction
            vmem_limit_bytes=int(vmem_limit),
        ),
        cost_estimate=cost,
    )(xp, w1p, gbp, w2p, b2p)

    return out_padded[:n, :out_dim].astype(x.dtype)


def make_params(key, in_dim, hidden_dim, out_dim):
    k1, k2, k3, k4 = jax.random.split(key, 4)
    # PyTorch Linear stores weight as (out, in); we build directly as (in, out).
    bound1 = 1.0 / jnp.sqrt(in_dim)
    w1 = jax.random.uniform(k1, (in_dim, hidden_dim), jnp.float32, -bound1, bound1)
    b1 = jax.random.uniform(k2, (1, hidden_dim), jnp.float32, -bound1, bound1)
    bound2 = 1.0 / jnp.sqrt(hidden_dim)
    w2 = jax.random.uniform(k3, (hidden_dim, out_dim), jnp.float32, -bound2, bound2)
    b2 = jax.random.uniform(k4, (1, out_dim), jnp.float32, -bound2, bound2)
    gamma = jnp.ones((1, hidden_dim), jnp.float32)    # BatchNorm1d init
    beta = jnp.zeros((1, hidden_dim), jnp.float32)
    return w1, b1, gamma, beta, w2, b2


def reference_forward(x, w1, b1, gamma, beta, w2, b2, matmul_dtype=jnp.bfloat16):
    # PyTorch semantics: Linear -> training-mode BatchNorm1d (biased var, eps=1e-5)
    # -> ReLU -> Linear.  matmul_dtype=bf16 mirrors the kernel's MXU input precision;
    # f32 gives the exact PyTorch-f32 reference for a looser sanity check.
    h = jnp.dot(x.astype(matmul_dtype), w1.astype(matmul_dtype),
                preferred_element_type=jnp.float32) + b1
    mean = jnp.mean(h, axis=0, keepdims=True)
    var = jnp.mean((h - mean) ** 2, axis=0, keepdims=True)
    h = (h - mean) * jax.lax.rsqrt(var + _BN_EPS) * gamma + beta
    a = jnp.maximum(h, 0.0)
    return jnp.dot(a.astype(matmul_dtype), w2.astype(matmul_dtype),
                   preferred_element_type=jnp.float32) + b2


if __name__ == "__main__":
    key = jax.random.PRNGKey(0)
    kx, kp = jax.random.split(key)

    N, in_dim, hidden_dim, out_dim = 32, 16, 32, 8
    x = jax.random.normal(kx, (N, in_dim), jnp.float32)
    params = make_params(kp, in_dim, hidden_dim, out_dim)

    try:
        fwd = jax.jit(functools.partial(mlp_forward, single_buffer_invariants=True))
        out = jax.block_until_ready(fwd(x, *params))
    except Exception:
        # Fallback for jax versions where pipeline_mode on top-level pallas_call
        # BlockSpecs is unsupported; correctness is identical, only VMEM use differs.
        fwd = jax.jit(functools.partial(mlp_forward, single_buffer_invariants=False))
        out = jax.block_until_ready(fwd(x, *params))

    assert out.shape == (N, out_dim)
    assert out.dtype == jnp.float32

    ref_bf16 = reference_forward(x, *params, matmul_dtype=jnp.bfloat16)
    ref_f32 = reference_forward(x, *params, matmul_dtype=jnp.float32)
    assert jnp.allclose(out, ref_bf16, atol=2e-2, rtol=2e-2), (
        f"mismatch vs precision-matched reference: {jnp.max(jnp.abs(out - ref_bf16))}")
    assert jnp.allclose(out, ref_f32, atol=1e-1, rtol=1e-1), (
        f"mismatch vs f32 PyTorch reference: {jnp.max(jnp.abs(out - ref_f32))}")

    print("KERNEL_OK")
</pallas_src>

<mosaic_0001>
module attributes {stable_mosaic.version = 11 : i64} {
  func.func @mlp_kernel(%arg0: i32, %arg1: i32, %arg2: memref<32x128xbf16, #tpu.memory_space<vmem>>, %arg3: memref<128x128xbf16, #tpu.memory_space<vmem>>, %arg4: memref<2x128xf32, #tpu.memory_space<vmem>>, %arg5: memref<128x128xbf16, #tpu.memory_space<vmem>>, %arg6: memref<1x128xf32, #tpu.memory_space<vmem>>, %arg7: memref<32x128xf32, #tpu.memory_space<vmem>>) attributes {dimension_semantics = [#tpu.dimension_semantics<parallel>, #tpu.dimension_semantics<arbitrary>], iteration_bounds = array<i64: 1, 1>, scalar_prefetch = 0 : i64, scratch_operands = 0 : i64, tpu.core_type = #tpu.core_type<tc>, window_params = [{pipeline_mode = #tpu.pipeline_mode<synchronous>, transform_indices = @transform_0, window_bounds = array<i64: 32, 128>}, {transform_indices = @transform_1, window_bounds = array<i64: 128, 128>}, {transform_indices = @transform_2, window_bounds = array<i64: 2, 128>}, {transform_indices = @transform_3, window_bounds = array<i64: 128, 128>}, {pipeline_mode = #tpu.pipeline_mode<synchronous>, transform_indices = @transform_4, window_bounds = array<i64: 1, 128>}, {pipeline_mode = #tpu.pipeline_mode<synchronous>, transform_indices = @transform_5, window_bounds = array<i64: 32, 128>}]} {
    %c0 = arith.constant 0 : index
    %c0_0 = arith.constant 0 : index
    %0 = vector.load %arg2[%c0, %c0_0] : memref<32x128xbf16, #tpu.memory_space<vmem>>, vector<32x128xbf16>
    %c0_1 = arith.constant 0 : index
    %c0_2 = arith.constant 0 : index
    %1 = vector.load %arg3[%c0_1, %c0_2] : memref<128x128xbf16, #tpu.memory_space<vmem>>, vector<128x128xbf16>
    %cst = arith.constant dense<0.000000e+00> : vector<32x128xf32>
    %2 = tpu.matmul %0, %1, %cst {dimension_numbers = #tpu.dot_dimension_numbers<[1], [0], [0], [1], [0, 0, 1, 1], [], []>} : vector<32x128xbf16>, vector<128x128xbf16>, vector<32x128xf32> -> vector<32x128xf32>
    %cst_3 = arith.constant dense<0.000000e+00> : vector<128xf32>
    %3 = vector.multi_reduction <add>, %2, %cst_3 [0] : vector<32x128xf32> to vector<128xf32>
    %4 = vector.shape_cast %3 : vector<128xf32> to vector<1x128xf32>
    %cst_4 = arith.constant 3.125000e-02 : f32
    %5 = vector.broadcast %cst_4 : f32 to vector<1x128xf32>
    %6 = arith.mulf %4, %5 : vector<1x128xf32>
    %7 = vector.broadcast %6 : vector<1x128xf32> to vector<32x128xf32>
    %8 = arith.subf %2, %7 : vector<32x128xf32>
    %9 = arith.mulf %8, %8 : vector<32x128xf32>
    %cst_5 = arith.constant dense<0.000000e+00> : vector<128xf32>
    %10 = vector.multi_reduction <add>, %9, %cst_5 [0] : vector<32x128xf32> to vector<128xf32>
    %11 = vector.shape_cast %10 : vector<128xf32> to vector<1x128xf32>
    %cst_6 = arith.constant 3.125000e-02 : f32
    %12 = vector.broadcast %cst_6 : f32 to vector<1x128xf32>
    %13 = arith.mulf %11, %12 : vector<1x128xf32>
    %c0_7 = arith.constant 0 : index
    %c0_8 = arith.constant 0 : index
    %14 = vector.load %arg4[%c0_7, %c0_8] : memref<2x128xf32, #tpu.memory_space<vmem>>, vector<1x128xf32>
    %cst_9 = arith.constant 9.99999974E-6 : f32
    %15 = vector.broadcast %cst_9 : f32 to vector<1x128xf32>
    %16 = arith.addf %13, %15 : vector<1x128xf32>
    %17 = math.rsqrt %16 : vector<1x128xf32>
    %18 = arith.mulf %14, %17 : vector<1x128xf32>
    %19 = vector.broadcast %18 : vector<1x128xf32> to vector<32x128xf32>
    %20 = arith.mulf %8, %19 : vector<32x128xf32>
    %c1 = arith.constant 1 : index
    %c0_10 = arith.constant 0 : index
    %21 = vector.load %arg4[%c1, %c0_10] : memref<2x128xf32, #tpu.memory_space<vmem>>, vector<1x128xf32>
    %22 = vector.broadcast %21 : vector<1x128xf32> to vector<32x128xf32>
    %23 = arith.addf %20, %22 : vector<32x128xf32>
    %cst_11 = arith.constant 0.000000e+00 : f32
    %24 = vector.broadcast %cst_11 : f32 to vector<32x128xf32>
    %25 = arith.maximumf %23, %24 : vector<32x128xf32>
    %26 = arith.truncf %25 : vector<32x128xf32> to vector<32x128xbf16>
    %c0_12 = arith.constant 0 : index
    %c0_13 = arith.constant 0 : index
    %27 = vector.load %arg5[%c0_12, %c0_13] : memref<128x128xbf16, #tpu.memory_space<vmem>>, vector<128x128xbf16>
    %cst_14 = arith.constant dense<0.000000e+00> : vector<32x128xf32>
    %28 = tpu.matmul %26, %27, %cst_14 {dimension_numbers = #tpu.dot_dimension_numbers<[1], [0], [0], [1], [0, 0, 1, 1], [], []>} : vector<32x128xbf16>, vector<128x128xbf16>, vector<32x128xf32> -> vector<32x128xf32>
    %c0_i32 = arith.constant 0 : i32
    %29 = arith.cmpi eq, %arg1, %c0_i32 : i32
    %30 = arith.extui %29 : i1 to i32
    %c0_i32_15 = arith.constant 0 : i32
    %31 = arith.cmpi ne, %30, %c0_i32_15 : i32
    scf.if %31 {
      %c0_20 = arith.constant 0 : index
      %c0_21 = arith.constant 0 : index
      %35 = vector.load %arg6[%c0_20, %c0_21] : memref<1x128xf32, #tpu.memory_space<vmem>>, vector<1x128xf32>
      %36 = vector.shape_cast %35 : vector<1x128xf32> to vector<1x128xf32>
      %37 = vector.broadcast %36 : vector<1x128xf32> to vector<32x128xf32>
      %c0_22 = arith.constant 0 : index
      %c0_23 = arith.constant 0 : index
      %38 = vector.load %arg7[%c0_22, %c0_23] : memref<32x128xf32, #tpu.memory_space<vmem>>, vector<32x128xf32>
      tpu.vector_store %arg7[%c0_22, %c0_23], %37 {strides = array<i32>} : memref<32x128xf32, #tpu.memory_space<vmem>>, vector<32x128xf32>,
    } else {
    }
    %c0_16 = arith.constant 0 : index
    %c0_17 = arith.constant 0 : index
    %32 = vector.load %arg7[%c0_16, %c0_17] : memref<32x128xf32, #tpu.memory_space<vmem>>, vector<32x128xf32>
    %33 = arith.addf %32, %28 : vector<32x128xf32>
    %c0_18 = arith.constant 0 : index
    %c0_19 = arith.constant 0 : index
    %34 = vector.load %arg7[%c0_18, %c0_19] : memref<32x128xf32, #tpu.memory_space<vmem>>, vector<32x128xf32>
    tpu.vector_store %arg7[%c0_18, %c0_19], %33 {strides = array<i32>} : memref<32x128xf32, #tpu.memory_space<vmem>>, vector<32x128xf32>,
    return
  }
  func.func @transform_0(%arg0: i32, %arg1: i32) -> (i32, i32) {
    %c0_i32 = arith.constant 0 : i32
    %c0_i32_0 = arith.constant 0 : i32
    %c0_i32_1 = arith.constant 0 : i32
    return %c0_i32, %c0_i32_0 : i32, i32
  }
  func.func @transform_1(%arg0: i32, %arg1: i32) -> (i32, i32) {
    %c0_i32 = arith.constant 0 : i32
    %c0_i32_0 = arith.constant 0 : i32
    return %c0_i32, %arg1 : i32, i32
  }
  func.func @transform_2(%arg0: i32, %arg1: i32) -> (i32, i32) {
    %c0_i32 = arith.constant 0 : i32
    %c0_i32_0 = arith.constant 0 : i32
    return %c0_i32, %arg1 : i32, i32
  }
  func.func @transform_3(%arg0: i32, %arg1: i32) -> (i32, i32) {
    %c0_i32 = arith.constant 0 : i32
    return %arg1, %arg0 : i32, i32
  }
  func.func @transform_4(%arg0: i32, %arg1: i32) -> (i32, i32) {
    %c0_i32 = arith.constant 0 : i32
    %c0_i32_0 = arith.constant 0 : i32
    return %c0_i32, %arg0 : i32, i32
  }
  func.func @transform_5(%arg0: i32, %arg1: i32) -> (i32, i32) {
    %c0_i32 = arith.constant 0 : i32
    %c0_i32_0 = arith.constant 0 : i32
    return %c0_i32, %arg0 : i32, i32
  }
}

module attributes {stable_mosaic.version = 11 : i64} {
  func.func @mlp_kernel(%arg0: i32, %arg1: i32, %arg2: memref<32x128xbf16, #tpu.memory_space<vmem>>, %arg3: memref<128x128xbf16, #tpu.memory_space<vmem>>, %arg4: memref<2x128xf32, #tpu.memory_space<vmem>>, %arg5: memref<128x128xbf16, #tpu.memory_space<vmem>>, %arg6: memref<1x128xf32, #tpu.memory_space<vmem>>, %arg7: memref<32x128xf32, #tpu.memory_space<vmem>>) attributes {dimension_semantics = [#tpu.dimension_semantics<parallel>, #tpu.dimension_semantics<arbitrary>], iteration_bounds = array<i64: 1, 1>, scalar_prefetch = 0 : i64, scratch_operands = 0 : i64, tpu.core_type = #tpu.core_type<tc>, window_params = [{pipeline_mode = #tpu.pipeline_mode<synchronous>, transform_indices = @transform_0, window_bounds = array<i64: 32, 128>}, {transform_indices = @transform_1, window_bounds = array<i64: 128, 128>}, {transform_indices = @transform_2, window_bounds = array<i64: 2, 128>}, {transform_indices = @transform_3, window_bounds = array<i64: 128, 128>}, {transform_indices = @transform_4, window_bounds = array<i64: 1, 128>}, {transform_indices = @transform_5, window_bounds = array<i64: 32, 128>}]} {
    %c0 = arith.constant 0 : index
    %c0_0 = arith.constant 0 : index
    %0 = vector.load %arg2[%c0, %c0_0] : memref<32x128xbf16, #tpu.memory_space<vmem>>, vector<32x128xbf16>
    %c0_1 = arith.constant 0 : index
    %c0_2 = arith.constant 0 : index
    %1 = vector.load %arg3[%c0_1, %c0_2] : memref<128x128xbf16, #tpu.memory_space<vmem>>, vector<128x128xbf16>
    %cst = arith.constant dense<0.000000e+00> : vector<32x128xf32>
    %2 = tpu.matmul %0, %1, %cst {dimension_numbers = #tpu.dot_dimension_numbers<[1], [0], [0], [1], [0, 0, 1, 1], [], []>} : vector<32x128xbf16>, vector<128x128xbf16>, vector<32x128xf32> -> vector<32x128xf32>
    %cst_3 = arith.constant dense<0.000000e+00> : vector<128xf32>
    %3 = vector.multi_reduction <add>, %2, %cst_3 [0] : vector<32x128xf32> to vector<128xf32>
    %4 = vector.shape_cast %3 : vector<128xf32> to vector<1x128xf32>
    %cst_4 = arith.constant 3.125000e-02 : f32
    %5 = vector.broadcast %cst_4 : f32 to vector<1x128xf32>
    %6 = arith.mulf %4, %5 : vector<1x128xf32>
    %7 = vector.broadcast %6 : vector<1x128xf32> to vector<32x128xf32>
    %8 = arith.subf %2, %7 : vector<32x128xf32>
    %9 = arith.mulf %8, %8 : vector<32x128xf32>
    %cst_5 = arith.constant dense<0.000000e+00> : vector<128xf32>
    %10 = vector.multi_reduction <add>, %9, %cst_5 [0] : vector<32x128xf32> to vector<128xf32>
    %11 = vector.shape_cast %10 : vector<128xf32> to vector<1x128xf32>
    %cst_6 = arith.constant 3.125000e-02 : f32
    %12 = vector.broadcast %cst_6 : f32 to vector<1x128xf32>
    %13 = arith.mulf %11, %12 : vector<1x128xf32>
    %c0_7 = arith.constant 0 : index
    %c0_8 = arith.constant 0 : index
    %14 = vector.load %arg4[%c0_7, %c0_8] : memref<2x128xf32, #tpu.memory_space<vmem>>, vector<1x128xf32>
    %cst_9 = arith.constant 9.99999974E-6 : f32
    %15 = vector.broadcast %cst_9 : f32 to vector<1x128xf32>
    %16 = arith.addf %13, %15 : vector<1x128xf32>
    %17 = math.rsqrt %16 : vector<1x128xf32>
    %18 = arith.mulf %14, %17 : vector<1x128xf32>
    %19 = vector.broadcast %18 : vector<1x128xf32> to vector<32x128xf32>
    %20 = arith.mulf %8, %19 : vector<32x128xf32>
    %c1 = arith.constant 1 : index
    %c0_10 = arith.constant 0 : index
    %21 = vector.load %arg4[%c1, %c0_10] : memref<2x128xf32, #tpu.memory_space<vmem>>, vector<1x128xf32>
    %22 = vector.broadcast %21 : vector<1x128xf32> to vector<32x128xf32>
    %23 = arith.addf %20, %22 : vector<32x128xf32>
    %cst_11 = arith.constant 0.000000e+00 : f32
    %24 = vector.broadcast %cst_11 : f32 to vector<32x128xf32>
    %25 = arith.maximumf %23, %24 : vector<32x128xf32>
    %26 = arith.truncf %25 : vector<32x128xf32> to vector<32x128xbf16>
    %c0_12 = arith.constant 0 : index
    %c0_13 = arith.constant 0 : index
    %27 = vector.load %arg5[%c0_12, %c0_13] : memref<128x128xbf16, #tpu.memory_space<vmem>>, vector<128x128xbf16>
    %cst_14 = arith.constant dense<0.000000e+00> : vector<32x128xf32>
    %28 = tpu.matmul %26, %27, %cst_14 {dimension_numbers = #tpu.dot_dimension_numbers<[1], [0], [0], [1], [0, 0, 1, 1], [], []>} : vector<32x128xbf16>, vector<128x128xbf16>, vector<32x128xf32> -> vector<32x128xf32>
    %c0_i32 = arith.constant 0 : i32
    %29 = arith.cmpi eq, %arg1, %c0_i32 : i32
    %30 = arith.extui %29 : i1 to i32
    %c0_i32_15 = arith.constant 0 : i32
    %31 = arith.cmpi ne, %30, %c0_i32_15 : i32
    scf.if %31 {
      %c0_20 = arith.constant 0 : index
      %c0_21 = arith.constant 0 : index
      %35 = vector.load %arg6[%c0_20, %c0_21] : memref<1x128xf32, #tpu.memory_space<vmem>>, vector<1x128xf32>
      %36 = vector.shape_cast %35 : vector<1x128xf32> to vector<1x128xf32>
      %37 = vector.broadcast %36 : vector<1x128xf32> to vector<32x128xf32>
      %c0_22 = arith.constant 0 : index
      %c0_23 = arith.constant 0 : index
      %38 = vector.load %arg7[%c0_22, %c0_23] : memref<32x128xf32, #tpu.memory_space<vmem>>, vector<32x128xf32>
      tpu.vector_store %arg7[%c0_22, %c0_23], %37 {strides = array<i32>} : memref<32x128xf32, #tpu.memory_space<vmem>>, vector<32x128xf32>,
    } else {
    }
    %c0_16 = arith.constant 0 : index
    %c0_17 = arith.constant 0 : index
    %32 = vector.load %arg7[%c0_16, %c0_17] : memref<32x128xf32, #tpu.memory_space<vmem>>, vector<32x128xf32>
    %33 = arith.addf %32, %28 : vector<32x128xf32>
    %c0_18 = arith.constant 0 : index
    %c0_19 = arith.constant 0 : index
    %34 = vector.load %arg7[%c0_18, %c0_19] : memref<32x128xf32, #tpu.memory_space<vmem>>, vector<32x128xf32>
    tpu.vector_store %arg7[%c0_18, %c0_19], %33 {strides = array<i32>} : memref<32x128xf32, #tpu.memory_space<vmem>>, vector<32x128xf32>,
    return
  }
  func.func @transform_0(%arg0: i32, %arg1: i32) -> (i32, i32) {
    %c0_i32 = arith.constant 0 : i32
    %c0_i32_0 = arith.constant 0 : i32
    %c0_i32_1 = arith.constant 0 : i32
    return %c0_i32, %c0_i32_0 : i32, i32
  }
  func.func @transform_1(%arg0: i32, %arg1: i32) -> (i32, i32) {
    %c0_i32 = arith.constant 0 : i32
    %c0_i32_0 = arith.constant 0 : i32
    return %c0_i32, %arg1 : i32, i32
  }
  func.func @transform_2(%arg0: i32, %arg1: i32) -> (i32, i32) {
    %c0_i32 = arith.constant 0 : i32
    %c0_i32_0 = arith.constant 0 : i32
    return %c0_i32, %arg1 : i32, i32
  }
  func.func @transform_3(%arg0: i32, %arg1: i32) -> (i32, i32) {
    %c0_i32 = arith.constant 0 : i32
    return %arg1, %arg0 : i32, i32
  }
  func.func @transform_4(%arg0: i32, %arg1: i32) -> (i32, i32) {
    %c0_i32 = arith.constant 0 : i32
    %c0_i32_0 = arith.constant 0 : i32
    return %c0_i32, %arg0 : i32, i32
  }
  func.func @transform_5(%arg0: i32, %arg1: i32) -> (i32, i32) {
    %c0_i32 = arith.constant 0 : i32
    %c0_i32_0 = arith.constant 0 : i32
    return %c0_i32, %arg0 : i32, i32
  }
}

</mosaic_0001>

<llo_original>
// kernel: mlp_forward.1
$region0: #{mlp_forward.1}
  #allocation0 [shape = 'u32[]', space=smem, size = 0x4, offset = 0x4, fixed_abs, tag = 'smem constant byte address 0x4 - core index']
  #allocation1 [shape = 'u32[144,128]{1,0:T(1,128)}', space=vmem, size = 0x12000, scoped, tag = 'internal scratch']
  %s0 = inlined_call_operand.vmem [shape: bf16[32,128], index: 0, kind: input, shape index: {}]
  %s1 = inlined_call_operand.vmem [shape: bf16[128,128], index: 1, kind: input, shape index: {}]
  %s2 = inlined_call_operand.vmem [shape: f32[2,128], index: 2, kind: input, shape index: {}]
  %s3 = inlined_call_operand.vmem [shape: bf16[128,128], index: 3, kind: input, shape index: {}]
  %s4 = inlined_call_operand.vmem [shape: f32[1,128], index: 4, kind: input, shape index: {}]
  %s5 = inlined_call_operand.vmem [shape: f32[32,128], index: 5, kind: output, shape index: {}]
  %s6 = sld [smem:[#allocation0]]
  $region34: #{mlp_forward.1} parent=0
    _
  %s8 = ssub.s32 1, %s6
  %s9 = scalar_select 0, %s8, %s6
  // Predicated region
  $region2: #{mlp_forward.1} parent=0 // pred_check
    _
  $region3: #{mlp_forward.1} parent=0 // pred_check_branch
    %11 = sbr.rel (0) target = $region5
  $region4: #{mlp_forward.1} parent=0 // pred_region
    _
  $region5: #{mlp_forward.1} parent=0 // pred_fallthru
    _
  // Predicated region
  $region6: #{mlp_forward.1} parent=0 // pred_check
    _
  $region7: #{mlp_forward.1} parent=0 // pred_check_branch
    %13 = sbr.rel (0) target = $region9
  $region8: #{mlp_forward.1} parent=0 // pred_region
    _
  $region9: #{mlp_forward.1} parent=0 // pred_fallthru
    _
  // Predicated region
  $region10: #{mlp_forward.1} parent=0 // pred_check
    _
  $region11: #{mlp_forward.1} parent=0 // pred_check_branch
    %15 = sbr.rel (0) target = $region13
  $region12: #{mlp_forward.1} parent=0 // pred_region
    _
  $region13: #{mlp_forward.1} parent=0 // pred_fallthru
    _
  // Predicated region
  $region14: #{mlp_forward.1} parent=0 // pred_check
    _
  $region15: #{mlp_forward.1} parent=0 // pred_check_branch
    %17 = sbr.rel (0) target = $region17
  $region16: #{mlp_forward.1} parent=0 // pred_region
    _
  $region17: #{mlp_forward.1} parent=0 // pred_fallthru
    _
  // Predicated region
  $region18: #{mlp_forward.1} parent=0 // pred_check
    _
  $region19: #{mlp_forward.1} parent=0 // pred_check_branch
    %19 = sbr.rel (0) target = $region21
  $region20: #{mlp_forward.1} parent=0 // pred_region
    _
  $region21: #{mlp_forward.1} parent=0 // pred_fallthru
    _
  %v21 = vld [vmem:[%s0] sm:$0xf]
  %v22 = vld [vmem:[%s0 + $0x4] sm:$0xf]
  %v23 = vld [vmem:[%s0 + $0x8] sm:$0xf]
  %v24 = vld [vmem:[%s0 + $0xc] sm:$0xf]
  %v25 = vld [vmem:[%s1] sm:$0xf]
  %v26 = vld [vmem:[%s1 + $0x4] sm:$0xf]
  %v27 = vld [vmem:[%s1 + $0x8] sm:$0xf]
  %v28 = vld [vmem:[%s1 + $0xc] sm:$0xf]
  %v29 = vld [vmem:[%s1 + $0x10] sm:$0xf]
  %v30 = vld [vmem:[%s1 + $0x14] sm:$0xf]
  %v31 = vld [vmem:[%s1 + $0x18] sm:$0xf]
  %v32 = vld [vmem:[%s1 + $0x1c] sm:$0xf]
  %v33 = vld [vmem:[%s1 + $0x20] sm:$0xf]
  %v34 = vld [vmem:[%s1 + $0x24] sm:$0xf]
  %v35 = vld [vmem:[%s1 + $0x28] sm:$0xf]
  %v36 = vld [vmem:[%s1 + $0x2c] sm:$0xf]
  %v37 = vld [vmem:[%s1 + $0x30] sm:$0xf]
  %v38 = vld [vmem:[%s1 + $0x34] sm:$0xf]
  %v39 = vld [vmem:[%s1 + $0x38] sm:$0xf]
  %v40 = vld [vmem:[%s1 + $0x3c] sm:$0xf]
  %v45 = vunpack.c.l.b16 %v21
  %v46 = vunpack.c.l.b16 %v22
  %v47 = vunpack.c.l.b16 %v23
  %v48 = vunpack.c.l.b16 %v24
  %v49 = vpack.c.b16 %v46, %v45
  %v50 = vpack.c.b16 %v48, %v47
  %v69 = vunpack.c.l.b16 %v25
  %v70 = vunpack.c.l.b16 %v26
  %v71 = vunpack.c.l.b16 %v27
  %v72 = vunpack.c.l.b16 %v28
  %v73 = vunpack.c.l.b16 %v29
  %v74 = vunpack.c.l.b16 %v30
  %v75 = vunpack.c.l.b16 %v31
  %v76 = vunpack.c.l.b16 %v32
  %v77 = vunpack.c.l.b16 %v33
  %v78 = vunpack.c.l.b16 %v34
  %v79 = vunpack.c.l.b16 %v35
  %v80 = vunpack.c.l.b16 %v36
  %v81 = vunpack.c.l.b16 %v37
  %v82 = vunpack.c.l.b16 %v38
  %v83 = vunpack.c.l.b16 %v39
  %v84 = vunpack.c.l.b16 %v40
  %v85 = vpack.c.b16 %v70, %v69
  %v86 = vpack.c.b16 %v72, %v71
  %v87 = vpack.c.b16 %v74, %v73
  %v88 = vpack.c.b16 %v76, %v75
  %v89 = vpack.c.b16 %v78, %v77
  %v90 = vpack.c.b16 %v80, %v79
  %v91 = vpack.c.b16 %v82, %v81
  %v92 = vpack.c.b16 %v84, %v83
  %101 = vmatprep.subr.bf16.mxu0 0
  %102 = vmatpush1.bf16.msra.mxu0 %v85
  %103 = vmatprep.subr.bf16.mxu0 0
  %104 = vmatpush1.bf16.msra.mxu0 %v86
  %105 = vmatprep.subr.bf16.mxu0 0
  %106 = vmatpush1.bf16.msra.mxu0 %v87
  %107 = vmatprep.subr.bf16.mxu0 0
  %108 = vmatpush1.bf16.msra.mxu0 %v88
  %109 = vmatprep.subr.bf16.mxu0 0
  %110 = vmatpush1.bf16.msra.mxu0 %v89
  %111 = vmatprep.subr.bf16.mxu0 0
  %112 = vmatpush1.bf16.msra.mxu0 %v90
  %113 = vmatprep.subr.bf16.mxu0 0
  %114 = vmatpush1.bf16.msra.mxu0 %v91
  %115 = vmatprep.subr.bf16.mxu0 0
  %116 = vmatpush1.bf16.msra.mxu0 %v92
  %117 = vmatprep.subr.bf16.mxu0 0
  %118 = vmatpush1.bf16.msra.mxu0 0
  %119 = vmatprep.subr.bf16.mxu0 0
  %120 = vmatpush1.bf16.msra.mxu0 0
  %121 = vmatprep.subr.bf16.mxu0 0
  %122 = vmatpush1.bf16.msra.mxu0 0
  %123 = vmatprep.subr.bf16.mxu0 0
  %124 = vmatpush1.bf16.msra.mxu0 0
  %125 = vmatprep.subr.bf16.mxu0 0
  %126 = vmatpush1.bf16.msra.mxu0 0
  %127 = vmatprep.subr.bf16.mxu0 0
  %128 = vmatpush1.bf16.msra.mxu0 0
  %129 = vmatprep.subr.bf16.mxu0 0
  %130 = vmatpush1.bf16.msra.mxu0 0
  %131 = vmatprep.subr.bf16.mxu0 0
  %132 = vmatpush1.bf16.msra.mxu0 0
  %133 = vmatprep.mubr.bf16.mxu0 0
  %134 = vmatmul.mubr.bf16.gmra.mrb[0].mxu0 %v49
  %v135 = vpop.f32.mrb[0].mxu0
  %v136 = vadd.f32 0.0, %v135
  %v137 = vpop.f32.mrb[0].mxu0
  %v138 = vpop.f32.mrb[0].mxu0
  %v139 = vadd.f32 0.0, %v138
  %v140 = vpop.f32.mrb[0].mxu0
  %141 = vmatprep.mubr.bf16.mxu0 0
  %142 = vmatmul.mubr.bf16.gmra.mrb[0].mxu0 %v50
  %v143 = vpop.f32.mrb[0].mxu0
  %v144 = vadd.f32 0.0, %v143
  %v145 = vpop.f32.mrb[0].mxu0
  %v146 = vpop.f32.mrb[0].mxu0
  %v147 = vadd.f32 0.0, %v146
  %v148 = vpop.f32.mrb[0].mxu0
  %149 = vdwg.mxu0
  %v150 = vadd.f32 %v136, %v139
  %v151 = vadd.f32 %v150, %v144
  %v152 = vadd.f32 %v151, %v147
  %v153 = vrot.slane %v152, 4
  %v154 = vadd.f32 %v152, %v153
  %v155 = vrot.slane %v154, 2
  %v156 = vadd.f32 %v154, %v155
  %v157 = vrot.slane %v156, 1
  %v158 = vadd.f32 %v156, %v157
  %v159 = vmul.f32 %v158, 0.03125
  %v160 = vsub.f32 %v136, %v159
  %v161 = vsub.f32 %v139, %v159
  %v162 = vsub.f32 %v144, %v159
  %v163 = vsub.f32 %v147, %v159
  %v164 = vmul.f32 %v160, %v160
  %v165 = vmul.f32 %v161, %v161
  %v166 = vmul.f32 %v162, %v162
  %v167 = vmul.f32 %v163, %v163
  %v168 = vadd.f32 %v164, %v165
  %v169 = vadd.f32 %v168, %v166
  %v170 = vadd.f32 %v169, %v167
  %v171 = vrot.slane %v170, 4
  %v172 = vadd.f32 %v170, %v171
  %v173 = vrot.slane %v172, 2
  %v174 = vadd.f32 %v172, %v173
  %v175 = vrot.slane %v174, 1
  %v176 = vadd.f32 %v174, %v175
  %v177 = vmul.f32 %v176, 0.03125
  %v178 = vld [vmem:[%s2] sm:$0x1]
  %v179 = vadd.f32 %v177, 1e-05
  %v180 = vrsqrt.pop %v179
  %v181 = vmul.f32 %v178, %v180
  %v182 = vlaneseq
  %v183 = vshrl.u32 %v182, 7
  %v184 = vsub.s32 0, %v183
  %v185 = vrot.slane %v181, %v184
  %v186 = vmul.f32 %v160, %v185
  %v187 = vmul.f32 %v161, %v185
  %v188 = vmul.f32 %v162, %v185
  %v189 = vmul.f32 %v163, %v185
  %v190 = vld [vmem:[%s2 + $0x1] sm:$0x1]
  %v191 = vlaneseq
  %v192 = vshrl.u32 %v191, 7
  %v193 = vsub.s32 0, %v192
  %v194 = vrot.slane %v190, %v193
  %v195 = vadd.f32 %v186, %v194
  %v196 = vadd.f32 %v187, %v194
  %v197 = vadd.f32 %v188, %v194
  %v198 = vadd.f32 %v189, %v194
  %v199 = vmax.f32 %v195, 0.0
  %v200 = vmax.f32 %v196, 0.0
  %v201 = vmax.f32 %v197, 0.0
  %v202 = vmax.f32 %v198, 0.0
  %v203 = vpack.c.bf16 %v200, %v199
  %v204 = vpack.c.bf16 %v202, %v201
  %v205 = vld [vmem:[%s3] sm:$0xf]
  %v206 = vld [vmem:[%s3 + $0x4] sm:$0xf]
  %v207 = vld [vmem:[%s3 + $0x8] sm:$0xf]
  %v208 = vld [vmem:[%s3 + $0xc] sm:$0xf]
  %v209 = vld [vmem:[%s3 + $0x10] sm:$0xf]
  %v210 = vld [vmem:[%s3 + $0x14] sm:$0xf]
  %v211 = vld [vmem:[%s3 + $0x18] sm:$0xf]
  %v212 = vld [vmem:[%s3 + $0x1c] sm:$0xf]
  %v213 = vld [vmem:[%s3 + $0x20] sm:$0xf]
  %v214 = vld [vmem:[%s3 + $0x24] sm:$0xf]
  %v215 = vld [vmem:[%s3 + $0x28] sm:$0xf]
  %v216 = vld [vmem:[%s3 + $0x2c] sm:$0xf]
  %v217 = vld [vmem:[%s3 + $0x30] sm:$0xf]
  %v218 = vld [vmem:[%s3 + $0x34] sm:$0xf]
  %v219 = vld [vmem:[%s3 + $0x38] sm:$0xf]
  %v220 = vld [vmem:[%s3 + $0x3c] sm:$0xf]
  %v237 = vunpack.c.l.b16 %v205
  %v238 = vunpack.c.l.b16 %v206
  %v239 = vunpack.c.l.b16 %v207
  %v240 = vunpack.c.l.b16 %v208
  %v241 = vunpack.c.l.b16 %v209
  %v242 = vunpack.c.l.b16 %v210
  %v243 = vunpack.c.l.b16 %v211
  %v244 = vunpack.c.l.b16 %v212
  %v245 = vunpack.c.l.b16 %v213
  %v246 = vunpack.c.l.b16 %v214
  %v247 = vunpack.c.l.b16 %v215
  %v248 = vunpack.c.l.b16 %v216
  %v249 = vunpack.c.l.b16 %v217
  %v250 = vunpack.c.l.b16 %v218
  %v251 = vunpack.c.l.b16 %v219
  %v252 = vunpack.c.l.b16 %v220
  %v253 = vpack.c.b16 %v238, %v237
  %v254 = vpack.c.b16 %v240, %v239
  %v255 = vpack.c.b16 %v242, %v241
  %v256 = vpack.c.b16 %v244, %v243
  %v257 = vpack.c.b16 %v246, %v245
  %v258 = vpack.c.b16 %v248, %v247
  %v259 = vpack.c.b16 %v250, %v249
  %v260 = vpack.c.b16 %v252, %v251
  %269 = vmatprep.subr.bf16.mxu0 0
  %270 = vmatpush1.bf16.msra.mxu0 %v253
  %271 = vmatprep.subr.bf16.mxu0 0
  %272 = vmatpush1.bf16.msra.mxu0 %v254
  %273 = vmatprep.subr.bf16.mxu0 0
  %274 = vmatpush1.bf16.msra.mxu0 %v255
  %275 = vmatprep.subr.bf16.mxu0 0
  %276 = vmatpush1.bf16.msra.mxu0 %v256
  %277 = vmatprep.subr.bf16.mxu0 0
  %278 = vmatpush1.bf16.msra.mxu0 %v257
  %279 = vmatprep.subr.bf16.mxu0 0
  %280 = vmatpush1.bf16.msra.mxu0 %v258
  %281 = vmatprep.subr.bf16.mxu0 0
  %282 = vmatpush1.bf16.msra.mxu0 %v259
  %283 = vmatprep.subr.bf16.mxu0 0
  %284 = vmatpush1.bf16.msra.mxu0 %v260
  %285 = vmatprep.subr.bf16.mxu0 0
  %286 = vmatpush1.bf16.msra.mxu0 0
  %287 = vmatprep.subr.bf16.mxu0 0
  %288 = vmatpush1.bf16.msra.mxu0 0
  %289 = vmatprep.subr.bf16.mxu0 0
  %290 = vmatpush1.bf16.msra.mxu0 0
  %291 = vmatprep.subr.bf16.mxu0 0
  %292 = vmatpush1.bf16.msra.mxu0 0
  %293 = vmatprep.subr.bf16.mxu0 0
  %294 = vmatpush1.bf16.msra.mxu0 0
  %295 = vmatprep.subr.bf16.mxu0 0
  %296 = vmatpush1.bf16.msra.mxu0 0
  %297 = vmatprep.subr.bf16.mxu0 0
  %298 = vmatpush1.bf16.msra.mxu0 0
  %299 = vmatprep.subr.bf16.mxu0 0
  %300 = vmatpush1.bf16.msra.mxu0 0
  %301 = vmatprep.mubr.bf16.mxu0 0
  %302 = vmatmul.mubr.bf16.gmra.mrb[0].mxu0 %v203
  %v303 = vpop.f32.mrb[0].mxu0
  %v304 = vadd.f32 0.0, %v303
  %v305 = vpop.f32.mrb[0].mxu0
  %v306 = vpop.f32.mrb[0].mxu0
  %v307 = vadd.f32 0.0, %v306
  %v308 = vpop.f32.mrb[0].mxu0
  %309 = vmatprep.mubr.bf16.mxu0 0
  %310 = vmatmul.mubr.bf16.gmra.mrb[0].mxu0 %v204
  %v311 = vpop.f32.mrb[0].mxu0
  %v312 = vadd.f32 0.0, %v311
  %v313 = vpop.f32.mrb[0].mxu0
  %v314 = vpop.f32.mrb[0].mxu0
  %v315 = vadd.f32 0.0, %v314
  %v316 = vpop.f32.mrb[0].mxu0
  %317 = vdwg.mxu0
  %p318 = scmp.eq.s32.totalorder 0, 0
  // Predicated region
  $region22: #{mlp_forward.1} parent=0 // pred_check
    %p319 = pneg %p318
  $region23: #{mlp_forward.1} parent=0 // pred_check_branch
    %321 = sbr.rel (%p319) target = $region25
  $region24: #{mlp_forward.1} parent=0 // pred_region
    %v322 = vld [vmem:[%s4] sm:$0x1]
    %v324 = vlaneseq
    %v325 = vshrl.u32 %v324, 7
    %v326 = vsub.s32 0, %v325
    %v327 = vrot.slane %v322, %v326
    %329 = vst [vmem:[%s5] sm:$0xff] %v327
    %330 = vst [vmem:[%s5 + $0x8] sm:$0xff] %v327
    %331 = vst [vmem:[%s5 + $0x10] sm:$0xff] %v327
    %332 = vst [vmem:[%s5 + $0x18] sm:$0xff] %v327
  $region25: #{mlp_forward.1} parent=0 // pred_fallthru
    _
  %v333 = vld [vmem:[%s5] sm:$0xff]
  %v334 = vld [vmem:[%s5 + $0x8] sm:$0xff]
  %v335 = vld [vmem:[%s5 + $0x10] sm:$0xff]
  %v336 = vld [vmem:[%s5 + $0x18] sm:$0xff]
  %v337 = vadd.f32 %v333, %v304
  %v338 = vadd.f32 %v334, %v307
  %v339 = vadd.f32 %v335, %v312
  %v340 = vadd.f32 %v336, %v315
  %341 = vst [vmem:[%s5] sm:$0xff] %v337
  %342 = vst [vmem:[%s5 + $0x8] sm:$0xff] %v338
  %343 = vst [vmem:[%s5 + $0x10] sm:$0xff] %v339
  %344 = vst [vmem:[%s5 + $0x18] sm:$0xff] %v340
  // Predicated region
  $region26: #{mlp_forward.1} parent=0 // pred_check
    _
  $region27: #{mlp_forward.1} parent=0 // pred_check_branch
    %346 = sbr.rel (0) target = $region29
  $region28: #{mlp_forward.1} parent=0 // pred_region
    _
  $region29: #{mlp_forward.1} parent=0 // pred_fallthru
    _
  // Predicated region
  $region30: #{mlp_forward.1} parent=0 // pred_check
    _
  $region31: #{mlp_forward.1} parent=0 // pred_check_branch
    %348 = sbr.rel (0) target = $region33
  $region32: #{mlp_forward.1} parent=0 // pred_region
    _
  $region33: #{mlp_forward.1} parent=0 // pred_fallthru
    _

// kernel: mlp_forward.1
$region0: #{mlp_forward.1}
  #allocation0 [shape = 'u32[]', space=smem, size = 0x4, offset = 0x4, fixed_abs, tag = 'smem constant byte address 0x4 - core index']
  #allocation1 [shape = 'u32[144,128]{1,0:T(1,128)}', space=vmem, size = 0x12000, scoped, tag = 'internal scratch']
  %s0 = inlined_call_operand.vmem [shape: bf16[32,128], index: 0, kind: input, shape index: {}]
  %s1 = inlined_call_operand.vmem [shape: bf16[128,128], index: 1, kind: input, shape index: {}]
  %s2 = inlined_call_operand.vmem [shape: f32[2,128], index: 2, kind: input, shape index: {}]
  %s3 = inlined_call_operand.vmem [shape: bf16[128,128], index: 3, kind: input, shape index: {}]
  %s4 = inlined_call_operand.vmem [shape: f32[1,128], index: 4, kind: input, shape index: {}]
  %s5 = inlined_call_operand.vmem [shape: f32[32,128], index: 5, kind: output, shape index: {}]
  %s6 = sld [smem:[#allocation0]]
  $region34: #{mlp_forward.1} parent=0
    _
  %s8 = ssub.s32 1, %s6
  %s9 = scalar_select 0, %s8, %s6
  // Predicated region
  $region2: #{mlp_forward.1} parent=0 // pred_check
    _
  $region3: #{mlp_forward.1} parent=0 // pred_check_branch
    %11 = sbr.rel (0) target = $region5
  $region4: #{mlp_forward.1} parent=0 // pred_region
    _
  $region5: #{mlp_forward.1} parent=0 // pred_fallthru
    _
  // Predicated region
  $region6: #{mlp_forward.1} parent=0 // pred_check
    _
  $region7: #{mlp_forward.1} parent=0 // pred_check_branch
    %13 = sbr.rel (0) target = $region9
  $region8: #{mlp_forward.1} parent=0 // pred_region
    _
  $region9: #{mlp_forward.1} parent=0 // pred_fallthru
    _
  // Predicated region
  $region10: #{mlp_forward.1} parent=0 // pred_check
    _
  $region11: #{mlp_forward.1} parent=0 // pred_check_branch
    %15 = sbr.rel (0) target = $region13
  $region12: #{mlp_forward.1} parent=0 // pred_region
    _
  $region13: #{mlp_forward.1} parent=0 // pred_fallthru
    _
  // Predicated region
  $region14: #{mlp_forward.1} parent=0 // pred_check
    _
  $region15: #{mlp_forward.1} parent=0 // pred_check_branch
    %17 = sbr.rel (0) target = $region17
  $region16: #{mlp_forward.1} parent=0 // pred_region
    _
  $region17: #{mlp_forward.1} parent=0 // pred_fallthru
    _
  // Predicated region
  $region18: #{mlp_forward.1} parent=0 // pred_check
    _
  $region19: #{mlp_forward.1} parent=0 // pred_check_branch
    %19 = sbr.rel (0) target = $region21
  $region20: #{mlp_forward.1} parent=0 // pred_region
    _
  $region21: #{mlp_forward.1} parent=0 // pred_fallthru
    _
  %v21 = vld [vmem:[%s0] sm:$0xf]
  %v22 = vld [vmem:[%s0 + $0x4] sm:$0xf]
  %v23 = vld [vmem:[%s0 + $0x8] sm:$0xf]
  %v24 = vld [vmem:[%s0 + $0xc] sm:$0xf]
  %v25 = vld [vmem:[%s1] sm:$0xf]
  %v26 = vld [vmem:[%s1 + $0x4] sm:$0xf]
  %v27 = vld [vmem:[%s1 + $0x8] sm:$0xf]
  %v28 = vld [vmem:[%s1 + $0xc] sm:$0xf]
  %v29 = vld [vmem:[%s1 + $0x10] sm:$0xf]
  %v30 = vld [vmem:[%s1 + $0x14] sm:$0xf]
  %v31 = vld [vmem:[%s1 + $0x18] sm:$0xf]
  %v32 = vld [vmem:[%s1 + $0x1c] sm:$0xf]
  %v33 = vld [vmem:[%s1 + $0x20] sm:$0xf]
  %v34 = vld [vmem:[%s1 + $0x24] sm:$0xf]
  %v35 = vld [vmem:[%s1 + $0x28] sm:$0xf]
  %v36 = vld [vmem:[%s1 + $0x2c] sm:$0xf]
  %v37 = vld [vmem:[%s1 + $0x30] sm:$0xf]
  %v38 = vld [vmem:[%s1 + $0x34] sm:$0xf]
  %v39 = vld [vmem:[%s1 + $0x38] sm:$0xf]
  %v40 = vld [vmem:[%s1 + $0x3c] sm:$0xf]
  %v45 = vunpack.c.l.b16 %v21
  %v46 = vunpack.c.l.b16 %v22
  %v47 = vunpack.c.l.b16 %v23
  %v48 = vunpack.c.l.b16 %v24
  %v49 = vpack.c.b16 %v46, %v45
  %v50 = vpack.c.b16 %v48, %v47
  %v69 = vunpack.c.l.b16 %v25
  %v70 = vunpack.c.l.b16 %v26
  %v71 = vunpack.c.l.b16 %v27
  %v72 = vunpack.c.l.b16 %v28
  %v73 = vunpack.c.l.b16 %v29
  %v74 = vunpack.c.l.b16 %v30
  %v75 = vunpack.c.l.b16 %v31
  %v76 = vunpack.c.l.b16 %v32
  %v77 = vunpack.c.l.b16 %v33
  %v78 = vunpack.c.l.b16 %v34
  %v79 = vunpack.c.l.b16 %v35
  %v80 = vunpack.c.l.b16 %v36
  %v81 = vunpack.c.l.b16 %v37
  %v82 = vunpack.c.l.b16 %v38
  %v83 = vunpack.c.l.b16 %v39
  %v84 = vunpack.c.l.b16 %v40
  %v85 = vpack.c.b16 %v70, %v69
  %v86 = vpack.c.b16 %v72, %v71
  %v87 = vpack.c.b16 %v74, %v73
  %v88 = vpack.c.b16 %v76, %v75
  %v89 = vpack.c.b16 %v78, %v77
  %v90 = vpack.c.b16 %v80, %v79
  %v91 = vpack.c.b16 %v82, %v81
  %v92 = vpack.c.b16 %v84, %v83
  %101 = vmatprep.subr.bf16.mxu0 0
  %102 = vmatpush1.bf16.msra.mxu0 %v85
  %103 = vmatprep.subr.bf16.mxu0 0
  %104 = vmatpush1.bf16.msra.mxu0 %v86
  %105 = vmatprep.subr.bf16.mxu0 0
  %106 = vmatpush1.bf16.msra.mxu0 %v87
  %107 = vmatprep.subr.bf16.mxu0 0
  %108 = vmatpush1.bf16.msra.mxu0 %v88
  %109 = vmatprep.subr.bf16.mxu0 0
  %110 = vmatpush1.bf16.msra.mxu0 %v89
  %111 = vmatprep.subr.bf16.mxu0 0
  %112 = vmatpush1.bf16.msra.mxu0 %v90
  %113 = vmatprep.subr.bf16.mxu0 0
  %114 = vmatpush1.bf16.msra.mxu0 %v91
  %115 = vmatprep.subr.bf16.mxu0 0
  %116 = vmatpush1.bf16.msra.mxu0 %v92
  %117 = vmatprep.subr.bf16.mxu0 0
  %118 = vmatpush1.bf16.msra.mxu0 0
  %119 = vmatprep.subr.bf16.mxu0 0
  %120 = vmatpush1.bf16.msra.mxu0 0
  %121 = vmatprep.subr.bf16.mxu0 0
  %122 = vmatpush1.bf16.msra.mxu0 0
  %123 = vmatprep.subr.bf16.mxu0 0
  %124 = vmatpush1.bf16.msra.mxu0 0
  %125 = vmatprep.subr.bf16.mxu0 0
  %126 = vmatpush1.bf16.msra.mxu0 0
  %127 = vmatprep.subr.bf16.mxu0 0
  %128 = vmatpush1.bf16.msra.mxu0 0
  %129 = vmatprep.subr.bf16.mxu0 0
  %130 = vmatpush1.bf16.msra.mxu0 0
  %131 = vmatprep.subr.bf16.mxu0 0
  %132 = vmatpush1.bf16.msra.mxu0 0
  %133 = vmatprep.mubr.bf16.mxu0 0
  %134 = vmatmul.mubr.bf16.gmra.mrb[0].mxu0 %v49
  %v135 = vpop.f32.mrb[0].mxu0
  %v136 = vadd.f32 0.0, %v135
  %v137 = vpop.f32.mrb[0].mxu0
  %v138 = vpop.f32.mrb[0].mxu0
  %v139 = vadd.f32 0.0, %v138
  %v140 = vpop.f32.mrb[0].mxu0
  %141 = vmatprep.mubr.bf16.mxu0 0
  %142 = vmatmul.mubr.bf16.gmra.mrb[0].mxu0 %v50
  %v143 = vpop.f32.mrb[0].mxu0
  %v144 = vadd.f32 0.0, %v143
  %v145 = vpop.f32.mrb[0].mxu0
  %v146 = vpop.f32.mrb[0].mxu0
  %v147 = vadd.f32 0.0, %v146
  %v148 = vpop.f32.mrb[0].mxu0
  %149 = vdwg.mxu0
  %v150 = vadd.f32 %v136, %v139
  %v151 = vadd.f32 %v150, %v144
  %v152 = vadd.f32 %v151, %v147
  %v153 = vrot.slane %v152, 4
  %v154 = vadd.f32 %v152, %v153
  %v155 = vrot.slane %v154, 2
  %v156 = vadd.f32 %v154, %v155
  %v157 = vrot.slane %v156, 1
  %v158 = vadd.f32 %v156, %v157
  %v159 = vmul.f32 %v158, 0.03125
  %v160 = vsub.f32 %v136, %v159
  %v161 = vsub.f32 %v139, %v159
  %v162 = vsub.f32 %v144, %v159
  %v163 = vsub.f32 %v147, %v159
  %v164 = vmul.f32 %v160, %v160
  %v165 = vmul.f32 %v161, %v161
  %v166 = vmul.f32 %v162, %v162
  %v167 = vmul.f32 %v163, %v163
  %v168 = vadd.f32 %v164, %v165
  %v169 = vadd.f32 %v168, %v166
  %v170 = vadd.f32 %v169, %v167
  %v171 = vrot.slane %v170, 4
  %v172 = vadd.f32 %v170, %v171
  %v173 = vrot.slane %v172, 2
  %v174 = vadd.f32 %v172, %v173
  %v175 = vrot.slane %v174, 1
  %v176 = vadd.f32 %v174, %v175
  %v177 = vmul.f32 %v176, 0.03125
  %v178 = vld [vmem:[%s2] sm:$0x1]
  %v179 = vadd.f32 %v177, 1e-05
  %v180 = vrsqrt.pop %v179
  %v181 = vmul.f32 %v178, %v180
  %v182 = vlaneseq
  %v183 = vshrl.u32 %v182, 7
  %v184 = vsub.s32 0, %v183
  %v185 = vrot.slane %v181, %v184
  %v186 = vmul.f32 %v160, %v185
  %v187 = vmul.f32 %v161, %v185
  %v188 = vmul.f32 %v162, %v185
  %v189 = vmul.f32 %v163, %v185
  %v190 = vld [vmem:[%s2 + $0x1] sm:$0x1]
  %v191 = vlaneseq
  %v192 = vshrl.u32 %v191, 7
  %v193 = vsub.s32 0, %v192
  %v194 = vrot.slane %v190, %v193
  %v195 = vadd.f32 %v186, %v194
  %v196 = vadd.f32 %v187, %v194
  %v197 = vadd.f32 %v188, %v194
  %v198 = vadd.f32 %v189, %v194
  %v199 = vmax.f32 %v195, 0.0
  %v200 = vmax.f32 %v196, 0.0
  %v201 = vmax.f32 %v197, 0.0
  %v202 = vmax.f32 %v198, 0.0
  %v203 = vpack.c.bf16 %v200, %v199
  %v204 = vpack.c.bf16 %v202, %v201
  %v205 = vld [vmem:[%s3] sm:$0xf]
  %v206 = vld [vmem:[%s3 + $0x4] sm:$0xf]
  %v207 = vld [vmem:[%s3 + $0x8] sm:$0xf]
  %v208 = vld [vmem:[%s3 + $0xc] sm:$0xf]
  %v209 = vld [vmem:[%s3 + $0x10] sm:$0xf]
  %v210 = vld [vmem:[%s3 + $0x14] sm:$0xf]
  %v211 = vld [vmem:[%s3 + $0x18] sm:$0xf]
  %v212 = vld [vmem:[%s3 + $0x1c] sm:$0xf]
  %v213 = vld [vmem:[%s3 + $0x20] sm:$0xf]
  %v214 = vld [vmem:[%s3 + $0x24] sm:$0xf]
  %v215 = vld [vmem:[%s3 + $0x28] sm:$0xf]
  %v216 = vld [vmem:[%s3 + $0x2c] sm:$0xf]
  %v217 = vld [vmem:[%s3 + $0x30] sm:$0xf]
  %v218 = vld [vmem:[%s3 + $0x34] sm:$0xf]
  %v219 = vld [vmem:[%s3 + $0x38] sm:$0xf]
  %v220 = vld [vmem:[%s3 + $0x3c] sm:$0xf]
  %v237 = vunpack.c.l.b16 %v205
  %v238 = vunpack.c.l.b16 %v206
  %v239 = vunpack.c.l.b16 %v207
  %v240 = vunpack.c.l.b16 %v208
  %v241 = vunpack.c.l.b16 %v209
  %v242 = vunpack.c.l.b16 %v210
  %v243 = vunpack.c.l.b16 %v211
  %v244 = vunpack.c.l.b16 %v212
  %v245 = vunpack.c.l.b16 %v213
  %v246 = vunpack.c.l.b16 %v214
  %v247 = vunpack.c.l.b16 %v215
  %v248 = vunpack.c.l.b16 %v216
  %v249 = vunpack.c.l.b16 %v217
  %v250 = vunpack.c.l.b16 %v218
  %v251 = vunpack.c.l.b16 %v219
  %v252 = vunpack.c.l.b16 %v220
  %v253 = vpack.c.b16 %v238, %v237
  %v254 = vpack.c.b16 %v240, %v239
  %v255 = vpack.c.b16 %v242, %v241
  %v256 = vpack.c.b16 %v244, %v243
  %v257 = vpack.c.b16 %v246, %v245
  %v258 = vpack.c.b16 %v248, %v247
  %v259 = vpack.c.b16 %v250, %v249
  %v260 = vpack.c.b16 %v252, %v251
  %269 = vmatprep.subr.bf16.mxu0 0
  %270 = vmatpush1.bf16.msra.mxu0 %v253
  %271 = vmatprep.subr.bf16.mxu0 0
  %272 = vmatpush1.bf16.msra.mxu0 %v254
  %273 = vmatprep.subr.bf16.mxu0 0
  %274 = vmatpush1.bf16.msra.mxu0 %v255
  %275 = vmatprep.subr.bf16.mxu0 0
  %276 = vmatpush1.bf16.msra.mxu0 %v256
  %277 = vmatprep.subr.bf16.mxu0 0
  %278 = vmatpush1.bf16.msra.mxu0 %v257
  %279 = vmatprep.subr.bf16.mxu0 0
  %280 = vmatpush1.bf16.msra.mxu0 %v258
  %281 = vmatprep.subr.bf16.mxu0 0
  %282 = vmatpush1.bf16.msra.mxu0 %v259
  %283 = vmatprep.subr.bf16.mxu0 0
  %284 = vmatpush1.bf16.msra.mxu0 %v260
  %285 = vmatprep.subr.bf16.mxu0 0
  %286 = vmatpush1.bf16.msra.mxu0 0
  %287 = vmatprep.subr.bf16.mxu0 0
  %288 = vmatpush1.bf16.msra.mxu0 0
  %289 = vmatprep.subr.bf16.mxu0 0
  %290 = vmatpush1.bf16.msra.mxu0 0
  %291 = vmatprep.subr.bf16.mxu0 0
  %292 = vmatpush1.bf16.msra.mxu0 0
  %293 = vmatprep.subr.bf16.mxu0 0
  %294 = vmatpush1.bf16.msra.mxu0 0
  %295 = vmatprep.subr.bf16.mxu0 0
  %296 = vmatpush1.bf16.msra.mxu0 0
  %297 = vmatprep.subr.bf16.mxu0 0
  %298 = vmatpush1.bf16.msra.mxu0 0
  %299 = vmatprep.subr.bf16.mxu0 0
  %300 = vmatpush1.bf16.msra.mxu0 0
  %301 = vmatprep.mubr.bf16.mxu0 0
  %302 = vmatmul.mubr.bf16.gmra.mrb[0].mxu0 %v203
  %v303 = vpop.f32.mrb[0].mxu0
  %v304 = vadd.f32 0.0, %v303
  %v305 = vpop.f32.mrb[0].mxu0
  %v306 = vpop.f32.mrb[0].mxu0
  %v307 = vadd.f32 0.0, %v306
  %v308 = vpop.f32.mrb[0].mxu0
  %309 = vmatprep.mubr.bf16.mxu0 0
  %310 = vmatmul.mubr.bf16.gmra.mrb[0].mxu0 %v204
  %v311 = vpop.f32.mrb[0].mxu0
  %v312 = vadd.f32 0.0, %v311
  %v313 = vpop.f32.mrb[0].mxu0
  %v314 = vpop.f32.mrb[0].mxu0
  %v315 = vadd.f32 0.0, %v314
  %v316 = vpop.f32.mrb[0].mxu0
  %317 = vdwg.mxu0
  %p318 = scmp.eq.s32.totalorder 0, 0
  // Predicated region
  $region22: #{mlp_forward.1} parent=0 // pred_check
    %p319 = pneg %p318
  $region23: #{mlp_forward.1} parent=0 // pred_check_branch
    %321 = sbr.rel (%p319) target = $region25
  $region24: #{mlp_forward.1} parent=0 // pred_region
    %v322 = vld [vmem:[%s4] sm:$0x1]
    %v324 = vlaneseq
    %v325 = vshrl.u32 %v324, 7
    %v326 = vsub.s32 0, %v325
    %v327 = vrot.slane %v322, %v326
    %329 = vst [vmem:[%s5] sm:$0xff] %v327
    %330 = vst [vmem:[%s5 + $0x8] sm:$0xff] %v327
    %331 = vst [vmem:[%s5 + $0x10] sm:$0xff] %v327
    %332 = vst [vmem:[%s5 + $0x18] sm:$0xff] %v327
  $region25: #{mlp_forward.1} parent=0 // pred_fallthru
    _
  %v333 = vld [vmem:[%s5] sm:$0xff]
  %v334 = vld [vmem:[%s5 + $0x8] sm:$0xff]
  %v335 = vld [vmem:[%s5 + $0x10] sm:$0xff]
  %v336 = vld [vmem:[%s5 + $0x18] sm:$0xff]
  %v337 = vadd.f32 %v333, %v304
  %v338 = vadd.f32 %v334, %v307
  %v339 = vadd.f32 %v335, %v312
  %v340 = vadd.f32 %v336, %v315
  %341 = vst [vmem:[%s5] sm:$0xff] %v337
  %342 = vst [vmem:[%s5 + $0x8] sm:$0xff] %v338
  %343 = vst [vmem:[%s5 + $0x10] sm:$0xff] %v339
  %344 = vst [vmem:[%s5 + $0x18] sm:$0xff] %v340
  // Predicated region
  $region26: #{mlp_forward.1} parent=0 // pred_check
    _
  $region27: #{mlp_forward.1} parent=0 // pred_check_branch
    %346 = sbr.rel (0) target = $region29
  $region28: #{mlp_forward.1} parent=0 // pred_region
    _
  $region29: #{mlp_forward.1} parent=0 // pred_fallthru
    _
  // Predicated region
  $region30: #{mlp_forward.1} parent=0 // pred_check
    _
  $region31: #{mlp_forward.1} parent=0 // pred_check_branch
    %348 = sbr.rel (0) target = $region33
  $region32: #{mlp_forward.1} parent=0 // pred_region
    _
  $region33: #{mlp_forward.1} parent=0 // pred_fallthru
    _

</llo_original>
